<compile_context>
chip_gen: v7x
topology: tpu7x:2x2x1
jax: 0.10.0
libtpu: 0.0.40
codegen_flags: <defaults>
</compile_context>

<pallas_src>
import functools

import jax
import jax.numpy as jnp
from jax.experimental import pallas as pl
from jax.experimental.pallas import tpu as pltpu


def _round_up(n, m):
    return ((n + m - 1) // m) * m


def _auto_batch_block(batch, c_in, t_in, k_mult, top, ww, budget_bytes=8 << 20):
    """Pick how many batch samples to process per grid step (VMEM budget)."""
    per_sample = 4 * (2 * c_in * t_in          # input block, double buffered
                      + 2 * k_mult * c_in * top  # output block, double buffered
                      + c_in * ww)               # working scratch
    bt = max(1, min(batch, budget_bytes // max(per_sample, 1)))
    while batch % bt:
        bt -= 1
    return bt


def _dwconv_kernel(x_ref, w_ref, b_ref, o_ref, xw_ref, *, padding):
    # x_ref : (bt, C_in, T)            unpadded input block
    # w_ref : (K_mult, K_w, C_in, 1)   depthwise weights (channels on sublanes)
    # b_ref : (K_mult, C_in, 1)        bias (zeros when bias=False)
    # o_ref : (bt, K_mult, C_in, TOP)  lane-dense output block (TOP % 128 == 0)
    # xw_ref: (bt, C_in, WW)           lane-aligned working buffer (WW % 128 == 0)
    bt, c_in, t_in = x_ref.shape
    k_mult, k_w = w_ref.shape[0], w_ref.shape[1]
    top = o_ref.shape[-1]
    ww = xw_ref.shape[-1]

    # Stage x into the lane-aligned working buffer.  The tail [t_in, ww) is
    # never selected (masked below), so no zero-fill pass is needed.
    xw_ref[:, :, :t_in] = x_ref[...]
    xw = xw_ref[...]

    # Lane index, used to zero the conv-padding region after each rotation.
    lane = jax.lax.broadcasted_iota(jnp.int32, (1, 1, ww), 2)

    accs = [jnp.zeros((bt, c_in, ww), jnp.float32) for _ in range(k_mult)]
    for k in range(k_w):
        # Output position t needs x[t + k - padding].  Build that shifted view
        # with a circular lane rotation (XLU slot, co-issues with the VPU work)
        # plus a zero mask at the edges, instead of a lane-misaligned slice of
        # a padded HBM copy.
        s = padding - k                     # static Python int (may be negative)
        s_mod = s % ww
        rolled = pltpu.roll(xw, shift=s_mod, axis=2) if s_mod else xw
        valid = (lane >= s) & (lane < t_in + s)
        tap = jnp.where(valid, rolled, 0.0)
        for m in range(k_mult):
            accs[m] = accs[m] + w_ref[m, k] * tap   # (C_in,1) broadcast over lanes

    for m in range(k_mult):
        res = accs[m] + b_ref[m]
        # Prefix slice is 128-aligned on both ends -> unmasked, lane-dense store.
        o_ref[:, m, :, :] = res[:, :, :top].astype(o_ref.dtype)


def depthwise_conv1d(x, weight, bias=None, *, stride=1, padding=0, batch_block=None):
    """Depthwise 1-D convolution (PyTorch Conv1d with groups=in_channels).

    x:      (B, C_in, T)
    weight: (C_out, 1, K_w) with C_out = K * C_in  (PyTorch layout)
    bias:   (C_out,) or None
    returns (B, C_out, T_out) with T_out = T + 2*padding - K_w + 1
    """
    if stride != 1:
        # TODO(synk): stride > 1 needs a strided lane gather; the Conformer conv module uses stride=1.
        raise NotImplementedError("Pallas DepthwiseConv1d supports stride=1 only")

    B, c_in, t_in = x.shape
    c_out, _, k_w = weight.shape
    assert c_out % c_in == 0, "out_channels must be a multiple of in_channels"
    k_mult = c_out // c_in
    t_out = t_in + 2 * padding - k_w + 1
    assert t_out > 0

    top = _round_up(t_out, 128)            # lane-dense output width
    ww = max(_round_up(t_in, 128), top)    # lane-aligned working width

    if batch_block is None:
        batch_block = _auto_batch_block(B, c_in, t_in, k_mult, top, ww)
    assert B % batch_block == 0

    # (C_out, 1, K_w) -> (K_mult, K_w, C_in, 1): channels land on sublanes so the
    # per-tap weight broadcasts against (bt, C_in, WW) tiles with no relayout.
    w_r = jnp.transpose(weight.reshape(c_in, k_mult, k_w), (1, 2, 0))[..., None]
    if bias is None:
        bias = jnp.zeros((c_out,), x.dtype)
    b_r = jnp.transpose(bias.reshape(c_in, k_mult), (1, 0))[..., None]

    y = pl.pallas_call(
        functools.partial(_dwconv_kernel, padding=padding),
        out_shape=jax.ShapeDtypeStruct((B, k_mult, c_in, top), x.dtype),
        grid=(B // batch_block,),
        in_specs=[
            pl.BlockSpec((batch_block, c_in, t_in), lambda i: (i, 0, 0)),
            pl.BlockSpec((k_mult, k_w, c_in, 1), lambda i: (0, 0, 0, 0)),
            pl.BlockSpec((k_mult, c_in, 1), lambda i: (0, 0, 0)),
        ],
        out_specs=pl.BlockSpec((batch_block, k_mult, c_in, top),
                               lambda i: (i, 0, 0, 0)),
        scratch_shapes=[pltpu.VMEM((batch_block, c_in, ww), x.dtype)],
        compiler_params=pltpu.CompilerParams(dimension_semantics=("parallel",)),
    )(x, w_r, b_r)

    # (B, K_mult, C_in, TOP) -> PyTorch channel order (co = g*K_mult + m), then
    # drop the lane padding.  For the usual K_mult == 1 the transpose is free.
    y = jnp.transpose(y, (0, 2, 1, 3)).reshape(B, c_out, top)
    return y[:, :, :t_out]


def reference_depthwise_conv1d(x, weight, bias=None, *, stride=1, padding=0):
    """Pure-JAX reference mirroring PyTorch grouped-conv semantics exactly."""
    B, c_in, t_in = x.shape
    c_out, _, k_w = weight.shape
    k_mult = c_out // c_in
    t_out = (t_in + 2 * padding - k_w) // stride + 1
    xp = jnp.pad(x, ((0, 0), (0, 0), (padding, padding)))
    outs = []
    for co in range(c_out):
        g = co // k_mult
        acc = jnp.zeros((B, t_out), x.dtype)
        for k in range(k_w):
            acc = acc + weight[co, 0, k] * xp[:, g, k:k + stride * t_out:stride]
        if bias is not None:
            acc = acc + bias[co]
        outs.append(acc)
    return jnp.stack(outs, axis=1)


if __name__ == "__main__":
    key = jax.random.PRNGKey(0)
    k1, k2, k3, k4, k5 = jax.random.split(key, 5)

    # Case 1: Conformer-style depthwise conv (out_channels == in_channels, bias=False).
    B, C, T, KW, PAD = 2, 16, 48, 7, 3
    x1 = jax.random.normal(k1, (B, C, T), jnp.float32)
    w1 = 0.3 * jax.random.normal(k2, (C, 1, KW), jnp.float32)
    out1 = depthwise_conv1d(x1, w1, None, stride=1, padding=PAD)
    jax.block_until_ready(out1)
    ref1 = reference_depthwise_conv1d(x1, w1, None, stride=1, padding=PAD)
    assert out1.shape == (B, C, T + 2 * PAD - KW + 1), out1.shape
    assert jnp.allclose(out1, ref1, atol=1e-5, rtol=1e-5), \
        float(jnp.max(jnp.abs(out1 - ref1)))

    # Case 2: channel multiplier K=2 with bias (general depthwise form).
    B2, CIN, KM, T2, KW2, PAD2 = 2, 8, 2, 40, 3, 1
    COUT = CIN * KM
    x2 = jax.random.normal(k3, (B2, CIN, T2), jnp.float32)
    w2 = 0.3 * jax.random.normal(k4, (COUT, 1, KW2), jnp.float32)
    b2 = 0.1 * jax.random.normal(k5, (COUT,), jnp.float32)
    out2 = depthwise_conv1d(x2, w2, b2, stride=1, padding=PAD2)
    jax.block_until_ready(out2)
    ref2 = reference_depthwise_conv1d(x2, w2, b2, stride=1, padding=PAD2)
    assert out2.shape == (B2, COUT, T2 + 2 * PAD2 - KW2 + 1), out2.shape
    assert jnp.allclose(out2, ref2, atol=1e-5, rtol=1e-5), \
        float(jnp.max(jnp.abs(out2 - ref2)))

    print("KERNEL_OK")
</pallas_src>

<mosaic_0001>
module attributes {stable_mosaic.version = 11 : i64} {
  func.func @_dwconv_kernel(%arg0: i32, %arg1: memref<2x16x48xf32, #tpu.memory_space<vmem>>, %arg2: memref<1x7x16x1xf32, #tpu.memory_space<vmem>>, %arg3: memref<1x16x1xf32, #tpu.memory_space<vmem>>, %arg4: memref<2x1x16x128xf32, #tpu.memory_space<vmem>>, %arg5: memref<2x16x128xf32, #tpu.memory_space<vmem>>) attributes {dimension_semantics = [#tpu.dimension_semantics<parallel>], iteration_bounds = array<i64: 1>, scalar_prefetch = 0 : i64, scratch_operands = 1 : i64, tpu.core_type = #tpu.core_type<tc>, window_params = [{transform_indices = @transform_0, window_bounds = array<i64: 2, 16, 48>}, {pipeline_mode = #tpu.pipeline_mode<synchronous>, transform_indices = @transform_1, window_bounds = array<i64: 1, 7, 16, 1>}, {pipeline_mode = #tpu.pipeline_mode<synchronous>, transform_indices = @transform_2, window_bounds = array<i64: 1, 16, 1>}, {transform_indices = @transform_3, window_bounds = array<i64: 2, 1, 16, 128>}]} {
    %c0 = arith.constant 0 : index
    %c0_0 = arith.constant 0 : index
    %c0_1 = arith.constant 0 : index
    %0 = vector.load %arg1[%c0, %c0_0, %c0_1] : memref<2x16x48xf32, #tpu.memory_space<vmem>>, vector<2x16x48xf32>
    %c0_2 = arith.constant 0 : index
    %c0_3 = arith.constant 0 : index
    %c0_4 = arith.constant 0 : index
    %1 = vector.load %arg5[%c0_2, %c0_3, %c0_4] : memref<2x16x128xf32, #tpu.memory_space<vmem>>, vector<2x16x48xf32>
    tpu.vector_store %arg5[%c0_2, %c0_3, %c0_4], %0 {strides = array<i32>} : memref<2x16x128xf32, #tpu.memory_space<vmem>>, vector<2x16x48xf32>,
    %c0_5 = arith.constant 0 : index
    %c0_6 = arith.constant 0 : index
    %c0_7 = arith.constant 0 : index
    %2 = vector.load %arg5[%c0_5, %c0_6, %c0_7] : memref<2x16x128xf32, #tpu.memory_space<vmem>>, vector<2x16x128xf32>
    %3 = tpu.iota {dimensions = array<i32: 2>} : vector<1x1x128xi32>
    %cst = arith.constant 0.000000e+00 : f32
    %4 = vector.broadcast %cst : f32 to vector<2x16x128xf32>
    %c3_i32 = arith.constant 3 : i32
    %5 = tpu.dynamic_rotate %2 by %c3_i32 dim 2 : vector<2x16x128xf32>, i32 -> vector<2x16x128xf32>
    %c3_i32_8 = arith.constant 3 : i32
    %6 = vector.broadcast %c3_i32_8 : i32 to vector<1x1x128xi32>
    %7 = arith.cmpi sge, %3, %6 : vector<1x1x128xi32>
    %c51_i32 = arith.constant 51 : i32
    %8 = vector.broadcast %c51_i32 : i32 to vector<1x1x128xi32>
    %9 = arith.cmpi slt, %3, %8 : vector<1x1x128xi32>
    %10 = arith.andi %7, %9 : vector<1x1x128xi1>
    %cst_9 = arith.constant 0.000000e+00 : f32
    %11 = vector.shape_cast %10 : vector<1x1x128xi1> to vector<1x1x128xi1>
    %12 = vector.broadcast %11 : vector<1x1x128xi1> to vector<2x16x128xi1>
    %13 = vector.broadcast %cst_9 : f32 to vector<2x16x128xf32>
    %14 = arith.select %12, %5, %13 : vector<2x16x128xi1>, vector<2x16x128xf32>
    %c0_10 = arith.constant 0 : index
    %c0_11 = arith.constant 0 : index
    %c0_12 = arith.constant 0 : index
    %c0_13 = arith.constant 0 : index
    %15 = vector.load %arg2[%c0_10, %c0_11, %c0_12, %c0_13] : memref<1x7x16x1xf32, #tpu.memory_space<vmem>>, vector<1x1x16x1xf32>
    %16 = vector.shape_cast %15 : vector<1x1x16x1xf32> to vector<16x1xf32>
    %17 = vector.shape_cast %16 : vector<16x1xf32> to vector<1x16x1xf32>
    %18 = vector.broadcast %17 : vector<1x16x1xf32> to vector<2x16x128xf32>
    %19 = arith.mulf %18, %14 : vector<2x16x128xf32>
    %20 = arith.addf %4, %19 : vector<2x16x128xf32>
    %c2_i32 = arith.constant 2 : i32
    %21 = tpu.dynamic_rotate %2 by %c2_i32 dim 2 : vector<2x16x128xf32>, i32 -> vector<2x16x128xf32>
    %c2_i32_14 = arith.constant 2 : i32
    %22 = vector.broadcast %c2_i32_14 : i32 to vector<1x1x128xi32>
    %23 = arith.cmpi sge, %3, %22 : vector<1x1x128xi32>
    %c50_i32 = arith.constant 50 : i32
    %24 = vector.broadcast %c50_i32 : i32 to vector<1x1x128xi32>
    %25 = arith.cmpi slt, %3, %24 : vector<1x1x128xi32>
    %26 = arith.andi %23, %25 : vector<1x1x128xi1>
    %cst_15 = arith.constant 0.000000e+00 : f32
    %27 = vector.shape_cast %26 : vector<1x1x128xi1> to vector<1x1x128xi1>
    %28 = vector.broadcast %27 : vector<1x1x128xi1> to vector<2x16x128xi1>
    %29 = vector.broadcast %cst_15 : f32 to vector<2x16x128xf32>
    %30 = arith.select %28, %21, %29 : vector<2x16x128xi1>, vector<2x16x128xf32>
    %c0_16 = arith.constant 0 : index
    %c1 = arith.constant 1 : index
    %c0_17 = arith.constant 0 : index
    %c0_18 = arith.constant 0 : index
    %31 = vector.load %arg2[%c0_16, %c1, %c0_17, %c0_18] : memref<1x7x16x1xf32, #tpu.memory_space<vmem>>, vector<1x1x16x1xf32>
    %32 = vector.shape_cast %31 : vector<1x1x16x1xf32> to vector<16x1xf32>
    %33 = vector.shape_cast %32 : vector<16x1xf32> to vector<1x16x1xf32>
    %34 = vector.broadcast %33 : vector<1x16x1xf32> to vector<2x16x128xf32>
    %35 = arith.mulf %34, %30 : vector<2x16x128xf32>
    %36 = arith.addf %20, %35 : vector<2x16x128xf32>
    %c1_i32 = arith.constant 1 : i32
    %37 = tpu.dynamic_rotate %2 by %c1_i32 dim 2 : vector<2x16x128xf32>, i32 -> vector<2x16x128xf32>
    %c1_i32_19 = arith.constant 1 : i32
    %38 = vector.broadcast %c1_i32_19 : i32 to vector<1x1x128xi32>
    %39 = arith.cmpi sge, %3, %38 : vector<1x1x128xi32>
    %c49_i32 = arith.constant 49 : i32
    %40 = vector.broadcast %c49_i32 : i32 to vector<1x1x128xi32>
    %41 = arith.cmpi slt, %3, %40 : vector<1x1x128xi32>
    %42 = arith.andi %39, %41 : vector<1x1x128xi1>
    %cst_20 = arith.constant 0.000000e+00 : f32
    %43 = vector.shape_cast %42 : vector<1x1x128xi1> to vector<1x1x128xi1>
    %44 = vector.broadcast %43 : vector<1x1x128xi1> to vector<2x16x128xi1>
    %45 = vector.broadcast %cst_20 : f32 to vector<2x16x128xf32>
    %46 = arith.select %44, %37, %45 : vector<2x16x128xi1>, vector<2x16x128xf32>
    %c0_21 = arith.constant 0 : index
    %c2 = arith.constant 2 : index
    %c0_22 = arith.constant 0 : index
    %c0_23 = arith.constant 0 : index
    %47 = vector.load %arg2[%c0_21, %c2, %c0_22, %c0_23] : memref<1x7x16x1xf32, #tpu.memory_space<vmem>>, vector<1x1x16x1xf32>
    %48 = vector.shape_cast %47 : vector<1x1x16x1xf32> to vector<16x1xf32>
    %49 = vector.shape_cast %48 : vector<16x1xf32> to vector<1x16x1xf32>
    %50 = vector.broadcast %49 : vector<1x16x1xf32> to vector<2x16x128xf32>
    %51 = arith.mulf %50, %46 : vector<2x16x128xf32>
    %52 = arith.addf %36, %51 : vector<2x16x128xf32>
    %c0_i32 = arith.constant 0 : i32
    %53 = vector.broadcast %c0_i32 : i32 to vector<1x1x128xi32>
    %54 = arith.cmpi sge, %3, %53 : vector<1x1x128xi32>
    %c48_i32 = arith.constant 48 : i32
    %55 = vector.broadcast %c48_i32 : i32 to vector<1x1x128xi32>
    %56 = arith.cmpi slt, %3, %55 : vector<1x1x128xi32>
    %57 = arith.andi %54, %56 : vector<1x1x128xi1>
    %cst_24 = arith.constant 0.000000e+00 : f32
    %58 = vector.shape_cast %57 : vector<1x1x128xi1> to vector<1x1x128xi1>
    %59 = vector.broadcast %58 : vector<1x1x128xi1> to vector<2x16x128xi1>
    %60 = vector.broadcast %cst_24 : f32 to vector<2x16x128xf32>
    %61 = arith.select %59, %2, %60 : vector<2x16x128xi1>, vector<2x16x128xf32>
    %c0_25 = arith.constant 0 : index
    %c3 = arith.constant 3 : index
    %c0_26 = arith.constant 0 : index
    %c0_27 = arith.constant 0 : index
    %62 = vector.load %arg2[%c0_25, %c3, %c0_26, %c0_27] : memref<1x7x16x1xf32, #tpu.memory_space<vmem>>, vector<1x1x16x1xf32>
    %63 = vector.shape_cast %62 : vector<1x1x16x1xf32> to vector<16x1xf32>
    %64 = vector.shape_cast %63 : vector<16x1xf32> to vector<1x16x1xf32>
    %65 = vector.broadcast %64 : vector<1x16x1xf32> to vector<2x16x128xf32>
    %66 = arith.mulf %65, %61 : vector<2x16x128xf32>
    %67 = arith.addf %52, %66 : vector<2x16x128xf32>
    %c127_i32 = arith.constant 127 : i32
    %68 = tpu.dynamic_rotate %2 by %c127_i32 dim 2 : vector<2x16x128xf32>, i32 -> vector<2x16x128xf32>
    %c-1_i32 = arith.constant -1 : i32
    %69 = vector.broadcast %c-1_i32 : i32 to vector<1x1x128xi32>
    %70 = arith.cmpi sge, %3, %69 : vector<1x1x128xi32>
    %c47_i32 = arith.constant 47 : i32
    %71 = vector.broadcast %c47_i32 : i32 to vector<1x1x128xi32>
    %72 = arith.cmpi slt, %3, %71 : vector<1x1x128xi32>
    %73 = arith.andi %70, %72 : vector<1x1x128xi1>
    %cst_28 = arith.constant 0.000000e+00 : f32
    %74 = vector.shape_cast %73 : vector<1x1x128xi1> to vector<1x1x128xi1>
    %75 = vector.broadcast %74 : vector<1x1x128xi1> to vector<2x16x128xi1>
    %76 = vector.broadcast %cst_28 : f32 to vector<2x16x128xf32>
    %77 = arith.select %75, %68, %76 : vector<2x16x128xi1>, vector<2x16x128xf32>
    %c0_29 = arith.constant 0 : index
    %c4 = arith.constant 4 : index
    %c0_30 = arith.constant 0 : index
    %c0_31 = arith.constant 0 : index
    %78 = vector.load %arg2[%c0_29, %c4, %c0_30, %c0_31] : memref<1x7x16x1xf32, #tpu.memory_space<vmem>>, vector<1x1x16x1xf32>
    %79 = vector.shape_cast %78 : vector<1x1x16x1xf32> to vector<16x1xf32>
    %80 = vector.shape_cast %79 : vector<16x1xf32> to vector<1x16x1xf32>
    %81 = vector.broadcast %80 : vector<1x16x1xf32> to vector<2x16x128xf32>
    %82 = arith.mulf %81, %77 : vector<2x16x128xf32>
    %83 = arith.addf %67, %82 : vector<2x16x128xf32>
    %c126_i32 = arith.constant 126 : i32
    %84 = tpu.dynamic_rotate %2 by %c126_i32 dim 2 : vector<2x16x128xf32>, i32 -> vector<2x16x128xf32>
    %c-2_i32 = arith.constant -2 : i32
    %85 = vector.broadcast %c-2_i32 : i32 to vector<1x1x128xi32>
    %86 = arith.cmpi sge, %3, %85 : vector<1x1x128xi32>
    %c46_i32 = arith.constant 46 : i32
    %87 = vector.broadcast %c46_i32 : i32 to vector<1x1x128xi32>
    %88 = arith.cmpi slt, %3, %87 : vector<1x1x128xi32>
    %89 = arith.andi %86, %88 : vector<1x1x128xi1>
    %cst_32 = arith.constant 0.000000e+00 : f32
    %90 = vector.shape_cast %89 : vector<1x1x128xi1> to vector<1x1x128xi1>
    %91 = vector.broadcast %90 : vector<1x1x128xi1> to vector<2x16x128xi1>
    %92 = vector.broadcast %cst_32 : f32 to vector<2x16x128xf32>
    %93 = arith.select %91, %84, %92 : vector<2x16x128xi1>, vector<2x16x128xf32>
    %c0_33 = arith.constant 0 : index
    %c5 = arith.constant 5 : index
    %c0_34 = arith.constant 0 : index
    %c0_35 = arith.constant 0 : index
    %94 = vector.load %arg2[%c0_33, %c5, %c0_34, %c0_35] : memref<1x7x16x1xf32, #tpu.memory_space<vmem>>, vector<1x1x16x1xf32>
    %95 = vector.shape_cast %94 : vector<1x1x16x1xf32> to vector<16x1xf32>
    %96 = vector.shape_cast %95 : vector<16x1xf32> to vector<1x16x1xf32>
    %97 = vector.broadcast %96 : vector<1x16x1xf32> to vector<2x16x128xf32>
    %98 = arith.mulf %97, %93 : vector<2x16x128xf32>
    %99 = arith.addf %83, %98 : vector<2x16x128xf32>
    %c125_i32 = arith.constant 125 : i32
    %100 = tpu.dynamic_rotate %2 by %c125_i32 dim 2 : vector<2x16x128xf32>, i32 -> vector<2x16x128xf32>
    %c-3_i32 = arith.constant -3 : i32
    %101 = vector.broadcast %c-3_i32 : i32 to vector<1x1x128xi32>
    %102 = arith.cmpi sge, %3, %101 : vector<1x1x128xi32>
    %c45_i32 = arith.constant 45 : i32
    %103 = vector.broadcast %c45_i32 : i32 to vector<1x1x128xi32>
    %104 = arith.cmpi slt, %3, %103 : vector<1x1x128xi32>
    %105 = arith.andi %102, %104 : vector<1x1x128xi1>
    %cst_36 = arith.constant 0.000000e+00 : f32
    %106 = vector.shape_cast %105 : vector<1x1x128xi1> to vector<1x1x128xi1>
    %107 = vector.broadcast %106 : vector<1x1x128xi1> to vector<2x16x128xi1>
    %108 = vector.broadcast %cst_36 : f32 to vector<2x16x128xf32>
    %109 = arith.select %107, %100, %108 : vector<2x16x128xi1>, vector<2x16x128xf32>
    %c0_37 = arith.constant 0 : index
    %c6 = arith.constant 6 : index
    %c0_38 = arith.constant 0 : index
    %c0_39 = arith.constant 0 : index
    %110 = vector.load %arg2[%c0_37, %c6, %c0_38, %c0_39] : memref<1x7x16x1xf32, #tpu.memory_space<vmem>>, vector<1x1x16x1xf32>
    %111 = vector.shape_cast %110 : vector<1x1x16x1xf32> to vector<16x1xf32>
    %112 = vector.shape_cast %111 : vector<16x1xf32> to vector<1x16x1xf32>
    %113 = vector.broadcast %112 : vector<1x16x1xf32> to vector<2x16x128xf32>
    %114 = arith.mulf %113, %109 : vector<2x16x128xf32>
    %115 = arith.addf %99, %114 : vector<2x16x128xf32>
    %c0_40 = arith.constant 0 : index
    %c0_41 = arith.constant 0 : index
    %c0_42 = arith.constant 0 : index
    %116 = vector.load %arg3[%c0_40, %c0_41, %c0_42] : memref<1x16x1xf32, #tpu.memory_space<vmem>>, vector<1x16x1xf32>
    %117 = vector.shape_cast %116 : vector<1x16x1xf32> to vector<16x1xf32>
    %118 = vector.shape_cast %117 : vector<16x1xf32> to vector<1x16x1xf32>
    %119 = vector.broadcast %118 : vector<1x16x1xf32> to vector<2x16x128xf32>
    %120 = arith.addf %115, %119 : vector<2x16x128xf32>
    %c0_43 = arith.constant 0 : index
    %c0_44 = arith.constant 0 : index
    %c0_45 = arith.constant 0 : index
    %c0_46 = arith.constant 0 : index
    %121 = vector.load %arg4[%c0_43, %c0_44, %c0_45, %c0_46] : memref<2x1x16x128xf32, #tpu.memory_space<vmem>>, vector<2x1x16x128xf32>
    %122 = vector.shape_cast %121 : vector<2x1x16x128xf32> to vector<2x16x128xf32>
    %123 = vector.shape_cast %120 : vector<2x16x128xf32> to vector<2x1x16x128xf32>
    tpu.vector_store %arg4[%c0_43, %c0_44, %c0_45, %c0_46], %123 {strides = array<i32>} : memref<2x1x16x128xf32, #tpu.memory_space<vmem>>, vector<2x1x16x128xf32>,
    return
  }
  func.func @transform_0(%arg0: i32) -> (i32, i32, i32) {
    %c0_i32 = arith.constant 0 : i32
    %c0_i32_0 = arith.constant 0 : i32
    %c0_i32_1 = arith.constant 0 : i32
    return %arg0, %c0_i32, %c0_i32_0 : i32, i32, i32
  }
  func.func @transform_1(%arg0: i32) -> (i32, i32, i32, i32) {
    %c0_i32 = arith.constant 0 : i32
    %c0_i32_0 = arith.constant 0 : i32
    %c0_i32_1 = arith.constant 0 : i32
    %c0_i32_2 = arith.constant 0 : i32
    %c0_i32_3 = arith.constant 0 : i32
    return %c0_i32, %c0_i32_0, %c0_i32_1, %c0_i32_2 : i32, i32, i32, i32
  }
  func.func @transform_2(%arg0: i32) -> (i32, i32, i32) {
    %c0_i32 = arith.constant 0 : i32
    %c0_i32_0 = arith.constant 0 : i32
    %c0_i32_1 = arith.constant 0 : i32
    %c0_i32_2 = arith.constant 0 : i32
    return %c0_i32, %c0_i32_0, %c0_i32_1 : i32, i32, i32
  }
  func.func @transform_3(%arg0: i32) -> (i32, i32, i32, i32) {
    %c0_i32 = arith.constant 0 : i32
    %c0_i32_0 = arith.constant 0 : i32
    %c0_i32_1 = arith.constant 0 : i32
    %c0_i32_2 = arith.constant 0 : i32
    return %arg0, %c0_i32, %c0_i32_0, %c0_i32_1 : i32, i32, i32, i32
  }
}

</mosaic_0001>

<llo_original>
// kernel: tpu_custom_call.1
$region0: #{tpu_custom_call.1}
  #allocation0 [shape = 'u32[]', space=smem, size = 0x4, offset = 0x4, fixed_abs, tag = 'smem constant byte address 0x4 - core index']
  #allocation1 [shape = 'u32[144,128]{1,0:T(1,128)}', space=vmem, size = 0x12000, scoped, tag = 'internal scratch']
  #allocation2 [shape = 'f32[2,16,128]{2,1,0:T(8,128)}', space=vmem, size = 0x4000, scoped, tag = 'scratch operand']
  %s0 = inlined_call_operand.vmem [shape: f32[2,16,48], index: 0, kind: input, shape index: {}]
  %s1 = inlined_call_operand.vmem [shape: f32[1,7,16,1], index: 1, kind: input, shape index: {}]
  %s2 = inlined_call_operand.vmem [shape: f32[1,16,1], index: 2, kind: input, shape index: {}]
  %s3 = inlined_call_operand.hbm [shape: f32[2,1,16,128], index: 3, kind: output, shape index: {}]
  %s4 = sld [smem:[#allocation0]]
  $region22: #{tpu_custom_call.1} parent=0
    _
  %s6 = ssub.s32 1, %s4
  %s7 = scalar_select 0, %s6, %s4
  $region1: #{tpu_custom_call.1} parent=0
    #allocation3 [shape = 'u8[16384]{0}', space=vmem, size = 0x4000, scoped, tag = 'output window, operand 0, single buffered']
    #allocation4 [shape = 's32[1]{0}', space=sflag, size = 0x4, scoped, tag = 'scoped memory for tpu_custom_call.1']
    %8 = vsyncpa [#allocation4], 0
    // Predicated region
    $region2: #{tpu_custom_call.1} parent=1 // pred_check
      _
    $region3: #{tpu_custom_call.1} parent=1 // pred_check_branch
      %10 = sbr.rel (0) target = $region5
    $region4: #{tpu_custom_call.1} parent=1 // pred_region
      _
    $region5: #{tpu_custom_call.1} parent=1 // pred_fallthru
      _
    // Predicated region
    $region6: #{tpu_custom_call.1} parent=1 // pred_check
      _
    $region7: #{tpu_custom_call.1} parent=1 // pred_check_branch
      %12 = sbr.rel (0) target = $region9
    $region8: #{tpu_custom_call.1} parent=1 // pred_region
      _
    $region9: #{tpu_custom_call.1} parent=1 // pred_fallthru
      _
    // Predicated region
    $region10: #{tpu_custom_call.1} parent=1 // pred_check
      _
    $region11: #{tpu_custom_call.1} parent=1 // pred_check_branch
      %14 = sbr.rel (0) target = $region13
    $region12: #{tpu_custom_call.1} parent=1 // pred_region
      _
    $region13: #{tpu_custom_call.1} parent=1 // pred_fallthru
      _
    %v15 = vld [vmem:[%s0] sm:$0xff]
    %v16 = vld [vmem:[%s0 + $0x8] sm:$0xff]
    %v17 = vld [vmem:[%s0 + $0x10] sm:$0xff]
    %v18 = vld [vmem:[%s0 + $0x18] sm:$0xff]
    %vm19 = vcmask 392192
    %20 = vst.msk [vmem:[#allocation2] sm:$0xff] %vm19, %v15
    %21 = vst.msk [vmem:[#allocation2 + $0x8] sm:$0xff] %vm19, %v16
    %22 = vst.msk [vmem:[#allocation2 + $0x10] sm:$0xff] %vm19, %v17
    %23 = vst.msk [vmem:[#allocation2 + $0x18] sm:$0xff] %vm19, %v18
    %v24 = vld [vmem:[#allocation2] sm:$0xff]
    %v25 = vld [vmem:[#allocation2 + $0x8] sm:$0xff]
    %v26 = vld [vmem:[#allocation2 + $0x10] sm:$0xff]
    %v27 = vld [vmem:[#allocation2 + $0x18] sm:$0xff]
    %v28 = vlaneseq
    %v29 = vand.u32 %v28, 127
    %30 = vrot.lane.b32.xlu0 %v24, 3
    %v31 = vpop.permute.xlu0 %30
    %32 = vrot.lane.b32.xlu0 %v25, 3
    %v33 = vpop.permute.xlu0 %32
    %34 = vrot.lane.b32.xlu0 %v26, 3
    %v35 = vpop.permute.xlu0 %34
    %36 = vrot.lane.b32.xlu0 %v27, 3
    %v37 = vpop.permute.xlu0 %36
    %vm38 = vcmp.ge.s32.totalorder %v29, 3
    %vm39 = vcmp.lt.s32.totalorder %v29, 51
    %vm40 = vmand %vm38, %vm39
    %v41 = vsel %vm40, 1, 0
    %vm42 = vcmp.eq.s32.totalorder %v41, 1
    %v43 = vsel %vm42, %v31, 0.0
    %v44 = vsel %vm42, %v33, 0.0
    %v45 = vsel %vm42, %v35, 0.0
    %v46 = vsel %vm42, %v37, 0.0
    %v47 = vld [vmem:[%s1] sm:$0xff]
    %v48 = vld [vmem:[%s1 + $0x8] sm:$0xff]
    %50 = vset.pattern.permute.xlu0 0
    %51 = vperm.xlu0 %50, %v47
    %v52 = vpop.permute.xlu0 %51
    %55 = vset.pattern.permute.xlu0 0
    %56 = vperm.xlu0 %55, %v48
    %v57 = vpop.permute.xlu0 %56
    %v59 = vmul.f32 %v52, %v43
    %v60 = vmul.f32 %v57, %v44
    %v61 = vmul.f32 %v52, %v45
    %v62 = vmul.f32 %v57, %v46
    %v63 = vadd.f32 %v59, 0.0
    %v64 = vadd.f32 %v60, 0.0
    %v65 = vadd.f32 %v61, 0.0
    %v66 = vadd.f32 %v62, 0.0
    %67 = vrot.lane.b32.xlu0 %v24, 2
    %v68 = vpop.permute.xlu0 %67
    %69 = vrot.lane.b32.xlu0 %v25, 2
    %v70 = vpop.permute.xlu0 %69
    %71 = vrot.lane.b32.xlu0 %v26, 2
    %v72 = vpop.permute.xlu0 %71
    %73 = vrot.lane.b32.xlu0 %v27, 2
    %v74 = vpop.permute.xlu0 %73
    %vm75 = vcmp.ge.s32.totalorder %v29, 2
    %vm76 = vcmp.lt.s32.totalorder %v29, 50
    %vm77 = vmand %vm75, %vm76
    %v78 = vsel %vm77, 1, 0
    %vm79 = vcmp.eq.s32.totalorder %v78, 1
    %v80 = vsel %vm79, %v68, 0.0
    %v81 = vsel %vm79, %v70, 0.0
    %v82 = vsel %vm79, %v72, 0.0
    %v83 = vsel %vm79, %v74, 0.0
    %s84 = scalar_lea.vmem %s1, 16
    %v85 = vld [vmem:[%s84] sm:$0xff]
    %v86 = vld [vmem:[%s84 + $0x8] sm:$0xff]
    %88 = vset.pattern.permute.xlu0 0
    %89 = vperm.xlu0 %88, %v85
    %v90 = vpop.permute.xlu0 %89
    %93 = vset.pattern.permute.xlu0 0
    %94 = vperm.xlu0 %93, %v86
    %v95 = vpop.permute.xlu0 %94
    %v97 = vmul.f32 %v90, %v80
    %v98 = vmul.f32 %v95, %v81
    %v99 = vmul.f32 %v90, %v82
    %v100 = vmul.f32 %v95, %v83
    %v101 = vadd.f32 %v63, %v97
    %v102 = vadd.f32 %v64, %v98
    %v103 = vadd.f32 %v65, %v99
    %v104 = vadd.f32 %v66, %v100
    %105 = vrot.lane.b32.xlu0 %v24, 1
    %v106 = vpop.permute.xlu0 %105
    %107 = vrot.lane.b32.xlu0 %v25, 1
    %v108 = vpop.permute.xlu0 %107
    %109 = vrot.lane.b32.xlu0 %v26, 1
    %v110 = vpop.permute.xlu0 %109
    %111 = vrot.lane.b32.xlu0 %v27, 1
    %v112 = vpop.permute.xlu0 %111
    %vm113 = vcmp.ge.s32.totalorder %v29, 1
    %vm114 = vcmp.lt.s32.totalorder %v29, 49
    %vm115 = vmand %vm113, %vm114
    %v116 = vsel %vm115, 1, 0
    %vm117 = vcmp.eq.s32.totalorder %v116, 1
    %v118 = vsel %vm117, %v106, 0.0
    %v119 = vsel %vm117, %v108, 0.0
    %v120 = vsel %vm117, %v110, 0.0
    %v121 = vsel %vm117, %v112, 0.0
    %s122 = scalar_lea.vmem %s1, 32
    %v123 = vld [vmem:[%s122] sm:$0xff]
    %v124 = vld [vmem:[%s122 + $0x8] sm:$0xff]
    %126 = vset.pattern.permute.xlu0 0
    %127 = vperm.xlu0 %126, %v123
    %v128 = vpop.permute.xlu0 %127
    %131 = vset.pattern.permute.xlu0 0
    %132 = vperm.xlu0 %131, %v124
    %v133 = vpop.permute.xlu0 %132
    %v135 = vmul.f32 %v128, %v118
    %v136 = vmul.f32 %v133, %v119
    %v137 = vmul.f32 %v128, %v120
    %v138 = vmul.f32 %v133, %v121
    %v139 = vadd.f32 %v101, %v135
    %v140 = vadd.f32 %v102, %v136
    %v141 = vadd.f32 %v103, %v137
    %v142 = vadd.f32 %v104, %v138
    %vm143 = vcmp.ge.s32.totalorder %v29, 0
    %vm144 = vcmp.lt.s32.totalorder %v29, 48
    %vm145 = vmand %vm143, %vm144
    %v146 = vsel %vm145, 1, 0
    %vm147 = vcmp.eq.s32.totalorder %v146, 1
    %v148 = vsel %vm147, %v24, 0.0
    %v149 = vsel %vm147, %v25, 0.0
    %v150 = vsel %vm147, %v26, 0.0
    %v151 = vsel %vm147, %v27, 0.0
    %s152 = scalar_lea.vmem %s1, 48
    %v153 = vld [vmem:[%s152] sm:$0xff]
    %v154 = vld [vmem:[%s152 + $0x8] sm:$0xff]
    %156 = vset.pattern.permute.xlu0 0
    %157 = vperm.xlu0 %156, %v153
    %v158 = vpop.permute.xlu0 %157
    %161 = vset.pattern.permute.xlu0 0
    %162 = vperm.xlu0 %161, %v154
    %v163 = vpop.permute.xlu0 %162
    %v165 = vmul.f32 %v158, %v148
    %v166 = vmul.f32 %v163, %v149
    %v167 = vmul.f32 %v158, %v150
    %v168 = vmul.f32 %v163, %v151
    %v169 = vadd.f32 %v139, %v165
    %v170 = vadd.f32 %v140, %v166
    %v171 = vadd.f32 %v141, %v167
    %v172 = vadd.f32 %v142, %v168
    %173 = vrot.lane.b32.xlu0 %v24, 127
    %v174 = vpop.permute.xlu0 %173
    %175 = vrot.lane.b32.xlu0 %v25, 127
    %v176 = vpop.permute.xlu0 %175
    %177 = vrot.lane.b32.xlu0 %v26, 127
    %v178 = vpop.permute.xlu0 %177
    %179 = vrot.lane.b32.xlu0 %v27, 127
    %v180 = vpop.permute.xlu0 %179
    %vm181 = vcmp.ge.s32.totalorder %v29, 4294967295
    %vm182 = vcmp.lt.s32.totalorder %v29, 47
    %vm183 = vmand %vm181, %vm182
    %v184 = vsel %vm183, 1, 0
    %vm185 = vcmp.eq.s32.totalorder %v184, 1
    %v186 = vsel %vm185, %v174, 0.0
    %v187 = vsel %vm185, %v176, 0.0
    %v188 = vsel %vm185, %v178, 0.0
    %v189 = vsel %vm185, %v180, 0.0
    %s190 = scalar_lea.vmem %s1, 64
    %v191 = vld [vmem:[%s190] sm:$0xff]
    %v192 = vld [vmem:[%s190 + $0x8] sm:$0xff]
    %194 = vset.pattern.permute.xlu0 0
    %195 = vperm.xlu0 %194, %v191
    %v196 = vpop.permute.xlu0 %195
    %199 = vset.pattern.permute.xlu0 0
    %200 = vperm.xlu0 %199, %v192
    %v201 = vpop.permute.xlu0 %200
    %v203 = vmul.f32 %v196, %v186
    %v204 = vmul.f32 %v201, %v187
    %v205 = vmul.f32 %v196, %v188
    %v206 = vmul.f32 %v201, %v189
    %v207 = vadd.f32 %v169, %v203
    %v208 = vadd.f32 %v170, %v204
    %v209 = vadd.f32 %v171, %v205
    %v210 = vadd.f32 %v172, %v206
    %211 = vrot.lane.b32.xlu0 %v24, 126
    %v212 = vpop.permute.xlu0 %211
    %213 = vrot.lane.b32.xlu0 %v25, 126
    %v214 = vpop.permute.xlu0 %213
    %215 = vrot.lane.b32.xlu0 %v26, 126
    %v216 = vpop.permute.xlu0 %215
    %217 = vrot.lane.b32.xlu0 %v27, 126
    %v218 = vpop.permute.xlu0 %217
    %vm219 = vcmp.ge.s32.totalorder %v29, 4294967294
    %vm220 = vcmp.lt.s32.totalorder %v29, 46
    %vm221 = vmand %vm219, %vm220
    %v222 = vsel %vm221, 1, 0
    %vm223 = vcmp.eq.s32.totalorder %v222, 1
    %v224 = vsel %vm223, %v212, 0.0
    %v225 = vsel %vm223, %v214, 0.0
    %v226 = vsel %vm223, %v216, 0.0
    %v227 = vsel %vm223, %v218, 0.0
    %s228 = scalar_lea.vmem %s1, 80
    %v229 = vld [vmem:[%s228] sm:$0xff]
    %v230 = vld [vmem:[%s228 + $0x8] sm:$0xff]
    %232 = vset.pattern.permute.xlu0 0
    %233 = vperm.xlu0 %232, %v229
    %v234 = vpop.permute.xlu0 %233
    %237 = vset.pattern.permute.xlu0 0
    %238 = vperm.xlu0 %237, %v230
    %v239 = vpop.permute.xlu0 %238
    %v241 = vmul.f32 %v234, %v224
    %v242 = vmul.f32 %v239, %v225
    %v243 = vmul.f32 %v234, %v226
    %v244 = vmul.f32 %v239, %v227
    %v245 = vadd.f32 %v207, %v241
    %v246 = vadd.f32 %v208, %v242
    %v247 = vadd.f32 %v209, %v243
    %v248 = vadd.f32 %v210, %v244
    %249 = vrot.lane.b32.xlu0 %v24, 125
    %v250 = vpop.permute.xlu0 %249
    %251 = vrot.lane.b32.xlu0 %v25, 125
    %v252 = vpop.permute.xlu0 %251
    %253 = vrot.lane.b32.xlu0 %v26, 125
    %v254 = vpop.permute.xlu0 %253
    %255 = vrot.lane.b32.xlu0 %v27, 125
    %v256 = vpop.permute.xlu0 %255
    %vm257 = vcmp.ge.s32.totalorder %v29, 4294967293
    %vm258 = vcmp.lt.s32.totalorder %v29, 45
    %vm259 = vmand %vm257, %vm258
    %v260 = vsel %vm259, 1, 0
    %vm261 = vcmp.eq.s32.totalorder %v260, 1
    %v262 = vsel %vm261, %v250, 0.0
    %v263 = vsel %vm261, %v252, 0.0
    %v264 = vsel %vm261, %v254, 0.0
    %v265 = vsel %vm261, %v256, 0.0
    %s266 = scalar_lea.vmem %s1, 96
    %v267 = vld [vmem:[%s266] sm:$0xff]
    %v268 = vld [vmem:[%s266 + $0x8] sm:$0xff]
    %270 = vset.pattern.permute.xlu0 0
    %271 = vperm.xlu0 %270, %v267
    %v272 = vpop.permute.xlu0 %271
    %275 = vset.pattern.permute.xlu0 0
    %276 = vperm.xlu0 %275, %v268
    %v277 = vpop.permute.xlu0 %276
    %v279 = vmul.f32 %v272, %v262
    %v280 = vmul.f32 %v277, %v263
    %v281 = vmul.f32 %v272, %v264
    %v282 = vmul.f32 %v277, %v265
    %v283 = vadd.f32 %v245, %v279
    %v284 = vadd.f32 %v246, %v280
    %v285 = vadd.f32 %v247, %v281
    %v286 = vadd.f32 %v248, %v282
    %v287 = vld [vmem:[%s2] sm:$0xff]
    %v288 = vld [vmem:[%s2 + $0x8] sm:$0xff]
    %290 = vset.pattern.permute.xlu0 0
    %291 = vperm.xlu0 %290, %v287
    %v292 = vpop.permute.xlu0 %291
    %295 = vset.pattern.permute.xlu0 0
    %296 = vperm.xlu0 %295, %v288
    %v297 = vpop.permute.xlu0 %296
    %v299 = vadd.f32 %v283, %v292
    %v300 = vadd.f32 %v284, %v297
    %v301 = vadd.f32 %v285, %v292
    %v302 = vadd.f32 %v286, %v297
    %303 = vst [vmem:[#allocation3] sm:$0xff] %v299
    %304 = vst [vmem:[#allocation3 + $0x8] sm:$0xff] %v300
    %305 = vst [vmem:[#allocation3 + $0x10] sm:$0xff] %v301
    %306 = vst [vmem:[#allocation3 + $0x18] sm:$0xff] %v302
    // Predicated region
    $region14: #{tpu_custom_call.1} parent=1 // pred_check
      _
    $region15: #{tpu_custom_call.1} parent=1 // pred_check_branch
      %308 = sbr.rel (0) target = $region17
    $region16: #{tpu_custom_call.1} parent=1 // pred_region
      %s310 = ssub.s32 512, 512
      %311 = vsyncadd [#allocation4], %s310
      %s312 = sshll.u32 [#allocation3], 4
      %s313 = int_to_ptr.vmem [resolvable:$true] %s312
      %318 = dma.vmem_to_hbm [thread:$0]  %s313, 512, %s3, [#allocation4], 128, 128, 8
    $region17: #{tpu_custom_call.1} parent=1 // pred_fallthru
      _
    // Predicated region
    $region18: #{tpu_custom_call.1} parent=1 // pred_check
      _
    $region19: #{tpu_custom_call.1} parent=1 // pred_check_branch
      %320 = sbr.rel (0) target = $region21
    $region20: #{tpu_custom_call.1} parent=1 // pred_region
      %321 = dma.done [#allocation4], 512
    $region21: #{tpu_custom_call.1} parent=1 // pred_fallthru
      _
    %322 = vsyncpa [#allocation4], 1

</llo_original>
